<compile_context>
chip_gen: v6e
topology: v6e:2x2x1
jax: 0.10.0
libtpu: 0.0.40
codegen_flags: <defaults>
</compile_context>

<pallas_src>
import jax
import jax.numpy as jnp
from jax.experimental import pallas as pl
from jax.experimental.pallas import tpu as pltpu

_LANES = 128
_SUBLANES = 8
_DEFAULT_BLOCK_ROWS = 512


def _nll_kernel(pred_ref, yev_ref, upper_ref, strict_ref,
                cost_ref, nobs_ref,
                carry_ref, sumdiff_ref, nevent_ref):
    """One lane-dense row-block of the carried prefix-sum Cox NLL."""
    step = pl.program_id(0)

    @pl.when(step == 0)
    def _init():
        carry_ref[...] = jnp.zeros_like(carry_ref)
        sumdiff_ref[...] = jnp.zeros_like(sumdiff_ref)
        nevent_ref[...] = jnp.zeros_like(nevent_ref)

    p = pred_ref[...]                           # (R, 128) f32, shifted by max(pred)
    y = yev_ref[...].astype(jnp.float32)        # (R, 128) event indicator (0 at pads)
    r_rows = p.shape[0]

    e = jnp.exp(p)                              # exp(pred - max) in (0, 1]

    # Inclusive prefix sum along lanes: row_cs[r, c] = sum_{k <= c} e[r, k],
    # via the resident (128, 128) upper-triangular ones matrix (MXU).
    row_cs = jnp.dot(e, upper_ref[...], preferred_element_type=jnp.float32)

    # Per-row totals are simply the last lane of the inclusive lane prefix.
    row_tot = row_cs[:, _LANES - 1:_LANES]                              # (R, 1)

    # Exclusive prefix of per-row totals within the tile, via the resident
    # (R, R) strict-lower ones matrix (MXU; constant is hoisted, not rebuilt).
    row_prefix = jnp.dot(strict_ref[...], row_tot,
                         preferred_element_type=jnp.float32)            # (R, 1)

    carry = carry_ref[...]                      # (1, 1): prefix of prior tiles
    risk = row_cs + row_prefix + carry          # (R, 128) inclusive prefix sums

    diff = p - jnp.log(risk)

    # Per-step: sublane-only reduces into (1, 128) lane accumulators.
    sumdiff_ref[...] = sumdiff_ref[...] + jnp.sum(diff * y, axis=0, keepdims=True)
    nevent_ref[...] = nevent_ref[...] + jnp.sum(y, axis=0, keepdims=True)

    # Bottom-right element of `risk` already equals carry + sum(e) over the
    # tile, so no extra full-tile reduction is needed.  Padding slots only ever
    # FOLLOW the real samples, so their exp(0)=1 contribution can only affect
    # later all-padding rows (where yevent == 0), never a real risk set.
    carry_ref[...] = risk[r_rows - 1:r_rows, _LANES - 1:_LANES]

    @pl.when(step == pl.num_programs(0) - 1)
    def _finalize():
        n_obs = jnp.sum(nevent_ref[...], keepdims=True)      # (1, 1)
        s_diff = jnp.sum(sumdiff_ref[...], keepdims=True)    # (1, 1)
        cost_ref[...] = jnp.where(n_obs == 0.0,
                                  jnp.zeros_like(s_diff),
                                  -(s_diff / n_obs))
        nobs_ref[...] = n_obs


def negative_log_likelihood(pred, label, block_rows=None):
    """JAX/Pallas equivalent of NegativeLogLikelihood.forward.

    Args:
      pred:  (N, 1) (or (N,)) float array of linear predictors, rows sorted by
             descending survival time (as the PyTorch module assumes).
      label: (N, 2) array; column 0 = ytime (implicit via the sort order),
             column 1 = yevent (censoring indicator).
      block_rows: rows of 128 samples processed per grid step (multiple of 8).

    Returns:
      (cost, n_observed): cost has shape (1,), n_observed is a scalar.
    """
    pred = jnp.asarray(pred, jnp.float32).reshape(-1)                # (N,)
    # Slice the indicator column directly and ship it as bf16 (exact for 0/1).
    yevent = jnp.asarray(label)[:, 1].astype(jnp.bfloat16)           # (N,)
    n = pred.shape[0]

    # Stabilize exp: diff = pred - log(cumsum(exp(pred))) is shift-invariant.
    pred = pred - jnp.max(pred)

    rows = -(-n // _LANES)
    if block_rows is None:
        block_rows = _DEFAULT_BLOCK_ROWS
    block_rows = max(_SUBLANES, (block_rows // _SUBLANES) * _SUBLANES)
    # Never use a block bigger than the (8-rounded) number of real rows.
    block_rows = min(block_rows, -(-rows // _SUBLANES) * _SUBLANES)
    padded_rows = -(-rows // block_rows) * block_rows
    pad = padded_rows * _LANES - n

    # Lane-dense layout: 128 samples per vreg row.  Pads (pred=0, yevent=0)
    # sit strictly after all real samples, so they cannot perturb any real
    # sample's risk set and contribute nothing to the masked reductions.
    pred2d = jnp.pad(pred, (0, pad)).reshape(padded_rows, _LANES)
    yev2d = jnp.pad(yevent, (0, pad)).reshape(padded_rows, _LANES)

    # Constant scan matrices, built once in the wrapper (not per grid step) and
    # kept resident in VMEM via a constant index_map.
    li = jnp.arange(_LANES)
    upper = (li[:, None] <= li[None, :]).astype(jnp.float32)         # (128, 128)
    ri = jnp.arange(block_rows)
    strict_lower = (ri[None, :] < ri[:, None]).astype(jnp.float32)   # (R, R)

    grid = (padded_rows // block_rows,)

    cost2d, nobs2d = pl.pallas_call(
        _nll_kernel,
        out_shape=(
            jax.ShapeDtypeStruct((1, 1), jnp.float32),
            jax.ShapeDtypeStruct((1, 1), jnp.float32),
        ),
        grid_spec=pltpu.PrefetchScalarGridSpec(
            num_scalar_prefetch=0,
            grid=grid,
            in_specs=[
                pl.BlockSpec((block_rows, _LANES), lambda i: (i, 0)),
                pl.BlockSpec((block_rows, _LANES), lambda i: (i, 0)),
                pl.BlockSpec((_LANES, _LANES), lambda i: (0, 0)),        # resident
                pl.BlockSpec((block_rows, block_rows), lambda i: (0, 0)),  # resident
            ],
            out_specs=(
                pl.BlockSpec((1, 1), lambda i: (0, 0)),
                pl.BlockSpec((1, 1), lambda i: (0, 0)),
            ),
            scratch_shapes=[
                pltpu.VMEM((1, 1), jnp.float32),       # running prefix of exp(pred)
                pltpu.VMEM((1, _LANES), jnp.float32),  # lane-wise sum(diff * yevent)
                pltpu.VMEM((1, _LANES), jnp.float32),  # lane-wise event count
            ],
        ),
        compiler_params=pltpu.CompilerParams(
            dimension_semantics=("arbitrary",)),
    )(pred2d, yev2d, upper, strict_lower)

    cost = cost2d.reshape(1)
    n_observed = nobs2d.reshape(())
    return cost, n_observed


def _reference(pred, label):
    """Pure-JAX reference mirroring the PyTorch module (prefix-sum form)."""
    pred = jnp.asarray(pred, jnp.float32).reshape(-1)
    yevent = jnp.asarray(label)[:, 1].astype(jnp.float32)
    shifted = pred - jnp.max(pred)
    risk = jnp.cumsum(jnp.exp(shifted))
    diff = shifted - jnp.log(risk)          # == pred - log(tril @ exp(pred))
    n_obs = yevent.sum()
    s_diff = jnp.sum(diff * yevent)
    cost = jnp.where(n_obs == 0.0, 0.0, -(s_diff / n_obs))
    return cost.reshape(1), n_obs


if __name__ == "__main__":
    key = jax.random.PRNGKey(0)

    def make_inputs(k, n, event_p=0.6):
        k_pred, k_time, k_event = jax.random.split(k, 3)
        pred = jax.random.normal(k_pred, (n, 1), dtype=jnp.float32)
        ytime = jnp.sort(jax.random.uniform(k_time, (n,), dtype=jnp.float32) * 100.0)[::-1]
        yevent = jax.random.bernoulli(k_event, event_p, (n,)).astype(jnp.float32)
        label = jnp.stack([ytime, yevent], axis=1)   # (N, 2)
        return pred, label

    # Small single-tile case, a non-multiple-of-128 case, a forced small-block
    # multi-tile case (block_rows=8 -> 3 grid steps, exercises the carry), a
    # default-block multi-tile case (block_rows=512 -> 2 grid steps), and the
    # "no observed events" edge case.
    cases = [(16, None, 0.6), (300, None, 0.6), (2500, 8, 0.6),
             (70000, None, 0.6), (16, None, 0.0)]
    for n, br, p_evt in cases:
        pred, label = make_inputs(jax.random.fold_in(key, n + int(p_evt * 100)), n, p_evt)
        cost, n_observed = negative_log_likelihood(pred, label, block_rows=br)
        jax.block_until_ready((cost, n_observed))

        ref_cost, ref_nobs = _reference(pred, label)
        assert jnp.allclose(cost, ref_cost, rtol=2e-3, atol=2e-3), (n, cost, ref_cost)
        assert jnp.allclose(n_observed, ref_nobs), (n, n_observed, ref_nobs)

    print("KERNEL_OK")
</pallas_src>

<mosaic_0001>
module attributes {stable_mosaic.version = 11 : i64} {
  func.func @_nll_kernel(%arg0: i32, %arg1: memref<8x128xf32, #tpu.memory_space<vmem>>, %arg2: memref<8x128xbf16, #tpu.memory_space<vmem>>, %arg3: memref<128x128xf32, #tpu.memory_space<vmem>>, %arg4: memref<8x8xf32, #tpu.memory_space<vmem>>, %arg5: memref<1x1xf32, #tpu.memory_space<vmem>>, %arg6: memref<1x1xf32, #tpu.memory_space<vmem>>, %arg7: memref<1x1xf32, #tpu.memory_space<vmem>>, %arg8: memref<1x128xf32, #tpu.memory_space<vmem>>, %arg9: memref<1x128xf32, #tpu.memory_space<vmem>>) attributes {dimension_semantics = [#tpu.dimension_semantics<arbitrary>], iteration_bounds = array<i64: 1>, scalar_prefetch = 0 : i64, scratch_operands = 3 : i64, tpu.core_type = #tpu.core_type<tc>, window_params = [{transform_indices = @transform_0, window_bounds = array<i64: 8, 128>}, {transform_indices = @transform_1, window_bounds = array<i64: 8, 128>}, {pipeline_mode = #tpu.pipeline_mode<synchronous>, transform_indices = @transform_2, window_bounds = array<i64: 128, 128>}, {pipeline_mode = #tpu.pipeline_mode<synchronous>, transform_indices = @transform_3, window_bounds = array<i64: 8, 8>}, {pipeline_mode = #tpu.pipeline_mode<synchronous>, transform_indices = @transform_4, window_bounds = array<i64: 1, 1>}, {pipeline_mode = #tpu.pipeline_mode<synchronous>, transform_indices = @transform_5, window_bounds = array<i64: 1, 1>}]} {
    %c0_i32 = arith.constant 0 : i32
    %0 = arith.cmpi eq, %arg0, %c0_i32 : i32
    %1 = arith.extui %0 : i1 to i32
    %c0_i32_0 = arith.constant 0 : i32
    %2 = arith.cmpi ne, %1, %c0_i32_0 : i32
    scf.if %2 {
      %cst_25 = arith.constant 0.000000e+00 : f32
      %35 = vector.broadcast %cst_25 : f32 to vector<1x1xf32>
      %c0_26 = arith.constant 0 : index
      %c0_27 = arith.constant 0 : index
      %36 = vector.load %arg7[%c0_26, %c0_27] : memref<1x1xf32, #tpu.memory_space<vmem>>, vector<1x1xf32>
      tpu.vector_store %arg7[%c0_26, %c0_27], %35 {strides = array<i32>} : memref<1x1xf32, #tpu.memory_space<vmem>>, vector<1x1xf32>,
      %cst_28 = arith.constant 0.000000e+00 : f32
      %37 = vector.broadcast %cst_28 : f32 to vector<1x128xf32>
      %c0_29 = arith.constant 0 : index
      %c0_30 = arith.constant 0 : index
      %38 = vector.load %arg8[%c0_29, %c0_30] : memref<1x128xf32, #tpu.memory_space<vmem>>, vector<1x128xf32>
      tpu.vector_store %arg8[%c0_29, %c0_30], %37 {strides = array<i32>} : memref<1x128xf32, #tpu.memory_space<vmem>>, vector<1x128xf32>,
      %cst_31 = arith.constant 0.000000e+00 : f32
      %39 = vector.broadcast %cst_31 : f32 to vector<1x128xf32>
      %c0_32 = arith.constant 0 : index
      %c0_33 = arith.constant 0 : index
      %40 = vector.load %arg9[%c0_32, %c0_33] : memref<1x128xf32, #tpu.memory_space<vmem>>, vector<1x128xf32>
      tpu.vector_store %arg9[%c0_32, %c0_33], %39 {strides = array<i32>} : memref<1x128xf32, #tpu.memory_space<vmem>>, vector<1x128xf32>,
    } else {
    }
    %c0 = arith.constant 0 : index
    %c0_1 = arith.constant 0 : index
    %3 = vector.load %arg1[%c0, %c0_1] : memref<8x128xf32, #tpu.memory_space<vmem>>, vector<8x128xf32>
    %c0_2 = arith.constant 0 : index
    %c0_3 = arith.constant 0 : index
    %4 = vector.load %arg2[%c0_2, %c0_3] : memref<8x128xbf16, #tpu.memory_space<vmem>>, vector<8x128xbf16>
    %5 = arith.extf %4 : vector<8x128xbf16> to vector<8x128xf32>
    %6 = math.exp %3 : vector<8x128xf32>
    %c0_4 = arith.constant 0 : index
    %c0_5 = arith.constant 0 : index
    %7 = vector.load %arg3[%c0_4, %c0_5] : memref<128x128xf32, #tpu.memory_space<vmem>>, vector<128x128xf32>
    %cst = arith.constant dense<0.000000e+00> : vector<8x128xf32>
    %8 = tpu.matmul %6, %7, %cst {dimension_numbers = #tpu.dot_dimension_numbers<[1], [0], [0], [1], [0, 0, 1, 1], [], []>} : vector<8x128xf32>, vector<128x128xf32>, vector<8x128xf32> -> vector<8x128xf32>
    %9 = vector.extract_strided_slice %8 {offsets = [0, 127], sizes = [8, 1], strides = [1, 1]} : vector<8x128xf32> to vector<8x1xf32>
    %c0_6 = arith.constant 0 : index
    %c0_7 = arith.constant 0 : index
    %10 = vector.load %arg4[%c0_6, %c0_7] : memref<8x8xf32, #tpu.memory_space<vmem>>, vector<8x8xf32>
    %cst_8 = arith.constant dense<0.000000e+00> : vector<8x1xf32>
    %11 = tpu.matmul %10, %9, %cst_8 {dimension_numbers = #tpu.dot_dimension_numbers<[1], [0], [0], [1], [0, 0, 1, 1], [], []>} : vector<8x8xf32>, vector<8x1xf32>, vector<8x1xf32> -> vector<8x1xf32>
    %c0_9 = arith.constant 0 : index
    %c0_10 = arith.constant 0 : index
    %12 = vector.load %arg7[%c0_9, %c0_10] : memref<1x1xf32, #tpu.memory_space<vmem>>, vector<1x1xf32>
    %13 = vector.broadcast %11 : vector<8x1xf32> to vector<8x128xf32>
    %14 = arith.addf %8, %13 : vector<8x128xf32>
    %15 = vector.broadcast %12 : vector<1x1xf32> to vector<8x128xf32>
    %16 = arith.addf %14, %15 : vector<8x128xf32>
    %17 = math.log %16 : vector<8x128xf32>
    %18 = arith.subf %3, %17 : vector<8x128xf32>
    %c0_11 = arith.constant 0 : index
    %c0_12 = arith.constant 0 : index
    %19 = vector.load %arg8[%c0_11, %c0_12] : memref<1x128xf32, #tpu.memory_space<vmem>>, vector<1x128xf32>
    %20 = arith.mulf %18, %5 : vector<8x128xf32>
    %cst_13 = arith.constant dense<0.000000e+00> : vector<128xf32>
    %21 = vector.multi_reduction <add>, %20, %cst_13 [0] : vector<8x128xf32> to vector<128xf32>
    %22 = vector.shape_cast %21 : vector<128xf32> to vector<1x128xf32>
    %23 = arith.addf %19, %22 : vector<1x128xf32>
    %c0_14 = arith.constant 0 : index
    %c0_15 = arith.constant 0 : index
    %24 = vector.load %arg8[%c0_14, %c0_15] : memref<1x128xf32, #tpu.memory_space<vmem>>, vector<1x128xf32>
    tpu.vector_store %arg8[%c0_14, %c0_15], %23 {strides = array<i32>} : memref<1x128xf32, #tpu.memory_space<vmem>>, vector<1x128xf32>,
    %c0_16 = arith.constant 0 : index
    %c0_17 = arith.constant 0 : index
    %25 = vector.load %arg9[%c0_16, %c0_17] : memref<1x128xf32, #tpu.memory_space<vmem>>, vector<1x128xf32>
    %cst_18 = arith.constant dense<0.000000e+00> : vector<128xf32>
    %26 = vector.multi_reduction <add>, %5, %cst_18 [0] : vector<8x128xf32> to vector<128xf32>
    %27 = vector.shape_cast %26 : vector<128xf32> to vector<1x128xf32>
    %28 = arith.addf %25, %27 : vector<1x128xf32>
    %c0_19 = arith.constant 0 : index
    %c0_20 = arith.constant 0 : index
    %29 = vector.load %arg9[%c0_19, %c0_20] : memref<1x128xf32, #tpu.memory_space<vmem>>, vector<1x128xf32>
    tpu.vector_store %arg9[%c0_19, %c0_20], %28 {strides = array<i32>} : memref<1x128xf32, #tpu.memory_space<vmem>>, vector<1x128xf32>,
    %30 = vector.extract_strided_slice %16 {offsets = [7, 127], sizes = [1, 1], strides = [1, 1]} : vector<8x128xf32> to vector<1x1xf32>
    %c0_21 = arith.constant 0 : index
    %c0_22 = arith.constant 0 : index
    %31 = vector.load %arg7[%c0_21, %c0_22] : memref<1x1xf32, #tpu.memory_space<vmem>>, vector<1x1xf32>
    tpu.vector_store %arg7[%c0_21, %c0_22], %30 {strides = array<i32>} : memref<1x1xf32, #tpu.memory_space<vmem>>, vector<1x1xf32>,
    %c0_i32_23 = arith.constant 0 : i32
    %32 = arith.cmpi eq, %arg0, %c0_i32_23 : i32
    %33 = arith.extui %32 : i1 to i32
    %c0_i32_24 = arith.constant 0 : i32
    %34 = arith.cmpi ne, %33, %c0_i32_24 : i32
    scf.if %34 {
      %c0_25 = arith.constant 0 : index
      %c0_26 = arith.constant 0 : index
      %35 = vector.load %arg9[%c0_25, %c0_26] : memref<1x128xf32, #tpu.memory_space<vmem>>, vector<1x128xf32>
      %36 = vector.shape_cast %35 : vector<1x128xf32> to vector<1x1x128xf32>
      %cst_27 = arith.constant dense<0.000000e+00> : vector<1xf32>
      %37 = vector.multi_reduction <add>, %36, %cst_27 [1, 2] : vector<1x1x128xf32> to vector<1xf32>
      %38 = vector.shape_cast %37 : vector<1xf32> to vector<1x1x1xf32>
      %39 = vector.extract %38[0, 0, 0] : f32 from vector<1x1x1xf32>
      %40 = vector.broadcast %39 : f32 to vector<1x1xf32>
      %c0_28 = arith.constant 0 : index
      %c0_29 = arith.constant 0 : index
      %41 = vector.load %arg8[%c0_28, %c0_29] : memref<1x128xf32, #tpu.memory_space<vmem>>, vector<1x128xf32>
      %42 = vector.shape_cast %41 : vector<1x128xf32> to vector<1x1x128xf32>
      %cst_30 = arith.constant dense<0.000000e+00> : vector<1xf32>
      %43 = vector.multi_reduction <add>, %42, %cst_30 [1, 2] : vector<1x1x128xf32> to vector<1xf32>
      %44 = vector.shape_cast %43 : vector<1xf32> to vector<1x1x1xf32>
      %45 = vector.extract %44[0, 0, 0] : f32 from vector<1x1x1xf32>
      %46 = vector.broadcast %45 : f32 to vector<1x1xf32>
      %cst_31 = arith.constant 0.000000e+00 : f32
      %47 = vector.broadcast %cst_31 : f32 to vector<1x1xf32>
      %48 = arith.cmpf oeq, %40, %47 : vector<1x1xf32>
      %cst_32 = arith.constant 0.000000e+00 : f32
      %49 = vector.broadcast %cst_32 : f32 to vector<1x1xf32>
      %50 = arith.divf %46, %40 : vector<1x1xf32>
      %cst_33 = arith.constant 0.000000e+00 : f32
      %51 = vector.broadcast %cst_33 : f32 to vector<1x1xf32>
      %52 = arith.subf %51, %50 : vector<1x1xf32>
      %53 = arith.select %48, %49, %52 : vector<1x1xi1>, vector<1x1xf32>
      %c0_34 = arith.constant 0 : index
      %c0_35 = arith.constant 0 : index
      %54 = vector.load %arg5[%c0_34, %c0_35] : memref<1x1xf32, #tpu.memory_space<vmem>>, vector<1x1xf32>
      tpu.vector_store %arg5[%c0_34, %c0_35], %53 {strides = array<i32>} : memref<1x1xf32, #tpu.memory_space<vmem>>, vector<1x1xf32>,
      %c0_36 = arith.constant 0 : index
      %c0_37 = arith.constant 0 : index
      %55 = vector.load %arg6[%c0_36, %c0_37] : memref<1x1xf32, #tpu.memory_space<vmem>>, vector<1x1xf32>
      tpu.vector_store %arg6[%c0_36, %c0_37], %40 {strides = array<i32>} : memref<1x1xf32, #tpu.memory_space<vmem>>, vector<1x1xf32>,
    } else {
    }
    return
  }
  func.func @transform_0(%arg0: i32) -> (i32, i32) {
    %c0_i32 = arith.constant 0 : i32
    %c0_i32_0 = arith.constant 0 : i32
    return %arg0, %c0_i32 : i32, i32
  }
  func.func @transform_1(%arg0: i32) -> (i32, i32) {
    %c0_i32 = arith.constant 0 : i32
    %c0_i32_0 = arith.constant 0 : i32
    return %arg0, %c0_i32 : i32, i32
  }
  func.func @transform_2(%arg0: i32) -> (i32, i32) {
    %c0_i32 = arith.constant 0 : i32
    %c0_i32_0 = arith.constant 0 : i32
    %c0_i32_1 = arith.constant 0 : i32
    return %c0_i32, %c0_i32_0 : i32, i32
  }
  func.func @transform_3(%arg0: i32) -> (i32, i32) {
    %c0_i32 = arith.constant 0 : i32
    %c0_i32_0 = arith.constant 0 : i32
    %c0_i32_1 = arith.constant 0 : i32
    return %c0_i32, %c0_i32_0 : i32, i32
  }
  func.func @transform_4(%arg0: i32) -> (i32, i32) {
    %c0_i32 = arith.constant 0 : i32
    %c0_i32_0 = arith.constant 0 : i32
    %c0_i32_1 = arith.constant 0 : i32
    return %c0_i32, %c0_i32_0 : i32, i32
  }
  func.func @transform_5(%arg0: i32) -> (i32, i32) {
    %c0_i32 = arith.constant 0 : i32
    %c0_i32_0 = arith.constant 0 : i32
    %c0_i32_1 = arith.constant 0 : i32
    return %c0_i32, %c0_i32_0 : i32, i32
  }
}

</mosaic_0001>

<llo_original>
// kernel: tpu_custom_call.1
$region0: #{tpu_custom_call.1}
  #allocation0 [shape = 'u32[]', space=smem, size = 0x4, offset = 0x4, fixed_abs, tag = 'smem constant byte address 0x4 - core index']
  #allocation1 [shape = 'u32[144,128]{1,0:T(1,128)}', space=vmem, size = 0x12000, scoped, tag = 'internal scratch']
  #allocation2 [shape = 'f32[1,1]{1,0:T(1,128)}', space=vmem, size = 0x200, scoped, tag = 'scratch operand']
  #allocation3 [shape = 'f32[1,128]{1,0:T(1,128)}', space=vmem, size = 0x200, scoped, tag = 'scratch operand']
  #allocation4 [shape = 'f32[1,128]{1,0:T(1,128)}', space=vmem, size = 0x200, scoped, tag = 'scratch operand']
  %s0 = inlined_call_operand.hbm [shape: f32[8,128], index: 0, kind: input, shape index: {}]
  %s1 = inlined_call_operand.hbm [shape: bf16[8,128], index: 1, kind: input, shape index: {}]
  %s2 = inlined_call_operand.hbm [shape: f32[128,128], index: 2, kind: input, shape index: {}]
  %s3 = inlined_call_operand.hbm [shape: f32[8,8], index: 3, kind: input, shape index: {}]
  %s4 = inlined_call_operand.hbm [shape: f32[1,1], index: 4, kind: output, shape index: {0}]
  %s5 = inlined_call_operand.hbm [shape: f32[1,1], index: 5, kind: output, shape index: {1}]
  %6 = xla_tuple %s4, %s5
  %s7 = sld [smem:[#allocation0]]
  $region58: #{tpu_custom_call.1} parent=0
    _
  %s9 = ssub.s32 1, %s7
  %s10 = scalar_select 0, %s9, %s7
  $region1: #{tpu_custom_call.1} parent=0
    #allocation5 [shape = 'u8[4096]{0}', space=vmem, size = 0x1000, scoped, tag = 'input window, operand 0, single buffered']
    #allocation6 [shape = 's32[1]{0}', space=sflag, size = 0x4, scoped, tag = 'scoped memory for tpu_custom_call.1']
    #allocation7 [shape = 's32[1]{0}', space=sflag, size = 0x4, scoped, tag = 'scoped memory for tpu_custom_call.1']
    #allocation8 [shape = 'u8[2048]{0}', space=vmem, size = 0x800, scoped, tag = 'input window, operand 1, single buffered']
    #allocation9 [shape = 's32[1]{0}', space=sflag, size = 0x4, scoped, tag = 'scoped memory for tpu_custom_call.1']
    #allocation10 [shape = 'u8[65536]{0}', space=vmem, size = 0x10000, scoped, tag = 'input window, operand 2, single buffered']
    #allocation11 [shape = 'u8[4096]{0}', space=vmem, size = 0x1000, scoped, tag = 'input window, operand 3, single buffered']
    #allocation12 [shape = 's32[1]{0}', space=sflag, size = 0x4, scoped, tag = 'scoped memory for tpu_custom_call.1']
    #allocation13 [shape = 'u8[512]{0}', space=vmem, size = 0x400, scoped, tag = 'output window, operand 0, single buffered']
    #allocation14 [shape = 'u8[512]{0}', space=vmem, size = 0x400, scoped, tag = 'output window, operand 1, single buffered']
    #allocation15 [shape = 's32[1]{0}', space=sflag, size = 0x4, scoped, tag = 'scoped memory for tpu_custom_call.1']
    %11 = vsyncpa [#allocation6], 0
    %12 = vsyncpa [#allocation9], 0
    %13 = vsyncpa [#allocation12], 0
    %14 = vsyncpa [#allocation7], 0
    %15 = vsyncpa [#allocation15], 0
    // Predicated region
    $region2: #{tpu_custom_call.1} parent=1 // pred_check
      _
    $region3: #{tpu_custom_call.1} parent=1 // pred_check_branch
      %17 = sbr.rel (0) target = $region5
    $region4: #{tpu_custom_call.1} parent=1 // pred_region
      %s19 = ssub.s32 128, 128
      %20 = vsyncadd [#allocation6], %s19
      %s22 = sshll.u32 [#allocation5], 4
      %s23 = int_to_ptr.vmem [resolvable:$true] %s22
      %25 = dma.hbm_to_vmem [thread:$0]  %s0, 128, %s23, [#allocation6]
    $region5: #{tpu_custom_call.1} parent=1 // pred_fallthru
      _
    // Predicated region
    $region6: #{tpu_custom_call.1} parent=1 // pred_check
      _
    $region7: #{tpu_custom_call.1} parent=1 // pred_check_branch
      %27 = sbr.rel (0) target = $region9
    $region8: #{tpu_custom_call.1} parent=1 // pred_region
      %s29 = ssub.s32 64, 64
      %30 = vsyncadd [#allocation9], %s29
      %s32 = sshll.u32 [#allocation8], 4
      %s33 = int_to_ptr.vmem [resolvable:$true] %s32
      %35 = dma.hbm_to_vmem [thread:$0]  %s1, 64, %s33, [#allocation9]
    $region9: #{tpu_custom_call.1} parent=1 // pred_fallthru
      _
    // Predicated region
    $region10: #{tpu_custom_call.1} parent=1 // pred_check
      _
    $region11: #{tpu_custom_call.1} parent=1 // pred_check_branch
      %37 = sbr.rel (0) target = $region13
    $region12: #{tpu_custom_call.1} parent=1 // pred_region
      %s39 = ssub.s32 2048, 2048
      %40 = vsyncadd [#allocation9], %s39
      %s41 = sshll.u32 [#allocation10], 4
      %s42 = int_to_ptr.vmem [resolvable:$true] %s41
      %47 = dma.hbm_to_vmem [thread:$0]  %s2, 2048, %s42, [#allocation9], 128, 128, 8
    $region13: #{tpu_custom_call.1} parent=1 // pred_fallthru
      _
    // Predicated region
    $region14: #{tpu_custom_call.1} parent=1 // pred_check
      _
    $region15: #{tpu_custom_call.1} parent=1 // pred_check_branch
      %49 = sbr.rel (0) target = $region17
    $region16: #{tpu_custom_call.1} parent=1 // pred_region
      %s51 = ssub.s32 128, 128
      %52 = vsyncadd [#allocation12], %s51
      %s54 = sshll.u32 [#allocation11], 4
      %s55 = int_to_ptr.vmem [resolvable:$true] %s54
      %57 = dma.hbm_to_vmem [thread:$0]  %s3, 128, %s55, [#allocation12]
    $region17: #{tpu_custom_call.1} parent=1 // pred_fallthru
      _
    // Predicated region
    $region18: #{tpu_custom_call.1} parent=1 // pred_check
      _
    $region19: #{tpu_custom_call.1} parent=1 // pred_check_branch
      %59 = sbr.rel (0) target = $region21
    $region20: #{tpu_custom_call.1} parent=1 // pred_region
      %60 = dma.done [#allocation6], 128
    $region21: #{tpu_custom_call.1} parent=1 // pred_fallthru
      _
    // Predicated region
    $region22: #{tpu_custom_call.1} parent=1 // pred_check
      _
    $region23: #{tpu_custom_call.1} parent=1 // pred_check_branch
      %62 = sbr.rel (0) target = $region25
    $region24: #{tpu_custom_call.1} parent=1 // pred_region
      %63 = dma.done [#allocation9], 64
    $region25: #{tpu_custom_call.1} parent=1 // pred_fallthru
      _
    // Predicated region
    $region26: #{tpu_custom_call.1} parent=1 // pred_check
      _
    $region27: #{tpu_custom_call.1} parent=1 // pred_check_branch
      %65 = sbr.rel (0) target = $region29
    $region28: #{tpu_custom_call.1} parent=1 // pred_region
      %66 = dma.done [#allocation9], 2048
    $region29: #{tpu_custom_call.1} parent=1 // pred_fallthru
      _
    // Predicated region
    $region30: #{tpu_custom_call.1} parent=1 // pred_check
      _
    $region31: #{tpu_custom_call.1} parent=1 // pred_check_branch
      %68 = sbr.rel (0) target = $region33
    $region32: #{tpu_custom_call.1} parent=1 // pred_region
      %69 = dma.done [#allocation12], 128
    $region33: #{tpu_custom_call.1} parent=1 // pred_fallthru
      _
    %p70 = scmp.eq.s32.totalorder 0, 0
    // Predicated region
    $region34: #{tpu_custom_call.1} parent=1 // pred_check
      %p71 = pneg %p70
    $region35: #{tpu_custom_call.1} parent=1 // pred_check_branch
      %73 = sbr.rel (%p71) target = $region37
    $region36: #{tpu_custom_call.1} parent=1 // pred_region
      %vm74 = vcmask 0
      %75 = vst.msk [vmem:[#allocation2] sm:$0x1] %vm74, 0.0
      %76 = vst [vmem:[#allocation3] sm:$0x1] 0.0
      %77 = vst [vmem:[#allocation4] sm:$0x1] 0.0
    $region37: #{tpu_custom_call.1} parent=1 // pred_fallthru
      _
    %v78 = vld [vmem:[#allocation5] sm:$0xff]
    %v79 = vld [vmem:[#allocation8] sm:$0xf]
    %v80 = vunpack.c.l.bf16 %v79
    %v81 = vmul.f32 %v78, 1.442695
    %v82 = vpow.pop %v81
    %v83 = vld [vmem:[#allocation10] sm:$0xff]
    %v84 = vld [vmem:[#allocation10 + $0x8] sm:$0xff]
    %v85 = vld [vmem:[#allocation10 + $0x10] sm:$0xff]
    %v86 = vld [vmem:[#allocation10 + $0x18] sm:$0xff]
    %v87 = vld [vmem:[#allocation10 + $0x20] sm:$0xff]
    %v88 = vld [vmem:[#allocation10 + $0x28] sm:$0xff]
    %v89 = vld [vmem:[#allocation10 + $0x30] sm:$0xff]
    %v90 = vld [vmem:[#allocation10 + $0x38] sm:$0xff]
    %v91 = vld [vmem:[#allocation10 + $0x40] sm:$0xff]
    %v92 = vld [vmem:[#allocation10 + $0x48] sm:$0xff]
    %v93 = vld [vmem:[#allocation10 + $0x50] sm:$0xff]
    %v94 = vld [vmem:[#allocation10 + $0x58] sm:$0xff]
    %v95 = vld [vmem:[#allocation10 + $0x60] sm:$0xff]
    %v96 = vld [vmem:[#allocation10 + $0x68] sm:$0xff]
    %v97 = vld [vmem:[#allocation10 + $0x70] sm:$0xff]
    %v98 = vld [vmem:[#allocation10 + $0x78] sm:$0xff]
    %99 = vmatprep.subr.mxu0 0.0
    %100 = vmatpush1.msra.mxu0 %v98
    %101 = vmatprep.subr.mxu0 0.0
    %102 = vmatpush1.msra.mxu0 %v97
    %103 = vmatprep.subr.mxu0 0.0
    %104 = vmatpush1.msra.mxu0 %v96
    %105 = vmatprep.subr.mxu0 0.0
    %106 = vmatpush1.msra.mxu0 %v95
    %107 = vmatprep.subr.mxu0 0.0
    %108 = vmatpush1.msra.mxu0 %v94
    %109 = vmatprep.subr.mxu0 0.0
    %110 = vmatpush1.msra.mxu0 %v93
    %111 = vmatprep.subr.mxu0 0.0
    %112 = vmatpush1.msra.mxu0 %v92
    %113 = vmatprep.subr.mxu0 0.0
    %114 = vmatpush1.msra.mxu0 %v91
    %115 = vmatprep.subr.mxu0 0.0
    %116 = vmatpush1.msra.mxu0 %v90
    %117 = vmatprep.subr.mxu0 0.0
    %118 = vmatpush1.msra.mxu0 %v89
    %119 = vmatprep.subr.mxu0 0.0
    %120 = vmatpush1.msra.mxu0 %v88
    %121 = vmatprep.subr.mxu0 0.0
    %122 = vmatpush1.msra.mxu0 %v87
    %123 = vmatprep.subr.mxu0 0.0
    %124 = vmatpush1.msra.mxu0 %v86
    %125 = vmatprep.subr.mxu0 0.0
    %126 = vmatpush1.msra.mxu0 %v85
    %127 = vmatprep.subr.mxu0 0.0
    %128 = vmatpush1.msra.mxu0 %v84
    %129 = vmatprep.subr.mxu0 0.0
    %130 = vmatpush1.msra.mxu0 %v83
    %131 = vmatprep.subr.mxu0 0.0
    %132 = vmatpush2.msra.mxu0 0.0
    %133 = vmatprep.subr.mxu0 0.0
    %134 = vmatpush2.msra.mxu0 0.0
    %135 = vmatprep.subr.mxu0 0.0
    %136 = vmatpush2.msra.mxu0 0.0
    %137 = vmatprep.subr.mxu0 0.0
    %138 = vmatpush2.msra.mxu0 0.0
    %139 = vmatprep.subr.mxu0 0.0
    %140 = vmatpush2.msra.mxu0 0.0
    %141 = vmatprep.subr.mxu0 0.0
    %142 = vmatpush2.msra.mxu0 0.0
    %143 = vmatprep.subr.mxu0 0.0
    %144 = vmatpush2.msra.mxu0 0.0
    %145 = vmatprep.subr.mxu0 0.0
    %146 = vmatpush2.msra.mxu0 0.0
    %147 = vmatprep.subr.mxu0 0.0
    %148 = vmatpush2.msra.mxu0 0.0
    %149 = vmatprep.subr.mxu0 0.0
    %150 = vmatpush2.msra.mxu0 0.0
    %151 = vmatprep.subr.mxu0 0.0
    %152 = vmatpush2.msra.mxu0 0.0
    %153 = vmatprep.subr.mxu0 0.0
    %154 = vmatpush2.msra.mxu0 0.0
    %155 = vmatprep.subr.mxu0 0.0
    %156 = vmatpush2.msra.mxu0 0.0
    %157 = vmatprep.subr.mxu0 0.0
    %158 = vmatpush2.msra.mxu0 0.0
    %159 = vmatprep.subr.mxu0 0.0
    %160 = vmatpush2.msra.mxu0 0.0
    %161 = vmatprep.subr.mxu0 0.0
    %162 = vmatpush2.msra.mxu0 0.0
    %163 = vmatprep.mubr.f32.mxu0 0.0
    %164 = vmatmul.mubr.f32.gmra.mxu0 %v82
    %v165 = vpop.f32.mrf.mxu0
    %v166 = vadd.f32 0.0, %v165
    %v167 = vpop.f32.mrf.mxu0
    %168 = vdwg.mxu0
    %v169 = vld [vmem:[#allocation11] sm:$0xff]
    %171 = vrot.lane.b32.xlu0 %v166, 1
    %v172 = vpop.permute.xlu0 %171
    %vm174 = vcmask 64512
    %v176 = vsel %vm174, %v169, 0
    %178 = vmatprep.subr.mxu0 0.0
    %179 = vmatpush1.msra.mxu0 0.0
    %180 = vmatprep.subr.mxu0 0.0
    %181 = vmatpush1.msra.mxu0 0.0
    %182 = vmatprep.subr.mxu0 0.0
    %183 = vmatpush1.msra.mxu0 0.0
    %184 = vmatprep.subr.mxu0 0.0
    %185 = vmatpush1.msra.mxu0 0.0
    %186 = vmatprep.subr.mxu0 0.0
    %187 = vmatpush1.msra.mxu0 0.0
    %188 = vmatprep.subr.mxu0 0.0
    %189 = vmatpush1.msra.mxu0 0.0
    %190 = vmatprep.subr.mxu0 0.0
    %191 = vmatpush1.msra.mxu0 0.0
    %192 = vmatprep.subr.mxu0 0.0
    %193 = vmatpush1.msra.mxu0 0.0
    %194 = vmatprep.subr.mxu0 0.0
    %195 = vmatpush1.msra.mxu0 0.0
    %196 = vmatprep.subr.mxu0 0.0
    %197 = vmatpush1.msra.mxu0 0.0
    %198 = vmatprep.subr.mxu0 0.0
    %199 = vmatpush1.msra.mxu0 0.0
    %200 = vmatprep.subr.mxu0 0.0
    %201 = vmatpush1.msra.mxu0 0.0
    %202 = vmatprep.subr.mxu0 0.0
    %203 = vmatpush1.msra.mxu0 0.0
    %204 = vmatprep.subr.mxu0 0.0
    %205 = vmatpush1.msra.mxu0 0.0
    %206 = vmatprep.subr.mxu0 0.0
    %207 = vmatpush1.msra.mxu0 0.0
    %208 = vmatprep.subr.mxu0 0.0
    %209 = vmatpush1.msra.mxu0 %v172
    %210 = vmatprep.subr.mxu0 0.0
    %211 = vmatpush2.msra.mxu0 0.0
    %212 = vmatprep.subr.mxu0 0.0
    %213 = vmatpush2.msra.mxu0 0.0
    %214 = vmatprep.subr.mxu0 0.0
    %215 = vmatpush2.msra.mxu0 0.0
    %216 = vmatprep.subr.mxu0 0.0
    %217 = vmatpush2.msra.mxu0 0.0
    %218 = vmatprep.subr.mxu0 0.0
    %219 = vmatpush2.msra.mxu0 0.0
    %220 = vmatprep.subr.mxu0 0.0
    %221 = vmatpush2.msra.mxu0 0.0
    %222 = vmatprep.subr.mxu0 0.0
    %223 = vmatpush2.msra.mxu0 0.0
    %224 = vmatprep.subr.mxu0 0.0
    %225 = vmatpush2.msra.mxu0 0.0
    %226 = vmatprep.subr.mxu0 0.0
    %227 = vmatpush2.msra.mxu0 0.0
    %228 = vmatprep.subr.mxu0 0.0
    %229 = vmatpush2.msra.mxu0 0.0
    %230 = vmatprep.subr.mxu0 0.0
    %231 = vmatpush2.msra.mxu0 0.0
    %232 = vmatprep.subr.mxu0 0.0
    %233 = vmatpush2.msra.mxu0 0.0
    %234 = vmatprep.subr.mxu0 0.0
    %235 = vmatpush2.msra.mxu0 0.0
    %236 = vmatprep.subr.mxu0 0.0
    %237 = vmatpush2.msra.mxu0 0.0
    %238 = vmatprep.subr.mxu0 0.0
    %239 = vmatpush2.msra.mxu0 0.0
    %240 = vmatprep.subr.mxu0 0.0
    %241 = vmatpush2.msra.mxu0 0.0
    %242 = vmatprep.mubr.f32.mxu0 0.0
    %243 = vmatmul.mubr.f32.gmra.mxu0 %v176
    %v244 = vpop.f32.mrf.mxu0
    %v245 = vadd.f32 0.0, %v244
    %v246 = vpop.f32.mrf.mxu0
    %247 = vdwg.mxu0
    %v248 = vld [vmem:[#allocation2] sm:$0x1]
    %250 = vset.pattern.permute.xlu0 0
    %251 = vperm.xlu0 %250, %v245
    %v252 = vpop.permute.xlu0 %251
    %v254 = vadd.f32 %v166, %v252
    %v256 = vlaneseq
    %v257 = vshrl.u32 %v256, 7
    %v258 = vsub.s32 0, %v257
    %v259 = vrot.slane %v248, %v258
    %260 = vset.pattern.permute.xlu0 0
    %261 = vperm.xlu0 %260, %v259
    %v262 = vpop.permute.xlu0 %261
    %v264 = vadd.f32 %v254, %v262
    %v265 = vlog2.pop %v264
    %v266 = vmul.f32 %v265, 0.6931472
    %v267 = vsub.f32 %v78, %v266
    %v268 = vld [vmem:[#allocation3] sm:$0x1]
    %v269 = vmul.f32 %v267, %v80
    %v270 = vrot.slane %v269, 4
    %v271 = vadd.f32 %v269, %v270
    %v272 = vrot.slane %v271, 2
    %v273 = vadd.f32 %v271, %v272
    %v274 = vrot.slane %v273, 1
    %v275 = vadd.f32 %v273, %v274
    %v276 = vadd.f32 %v268, %v275
    %277 = vst [vmem:[#allocation3] sm:$0x1] %v276
    %v278 = vld [vmem:[#allocation4] sm:$0x1]
    %v279 = vrot.slane %v80, 4
    %v280 = vadd.f32 %v80, %v279
    %v281 = vrot.slane %v280, 2
    %v282 = vadd.f32 %v280, %v281
    %v283 = vrot.slane %v282, 1
    %v284 = vadd.f32 %v282, %v283
    %v285 = vadd.f32 %v278, %v284
    %286 = vst [vmem:[#allocation4] sm:$0x1] %v285
    %288 = vrot.lane.b32.xlu0 %v264, 1
    %v289 = vpop.permute.xlu0 %288
    %vm291 = vcmask 7175
    %292 = vst.msk [vmem:[#allocation2 - $0x7] sm:$0x80] %vm291, %v289
    // Predicated region
    $region38: #{tpu_custom_call.1} parent=1 // pred_check
      %p293 = pneg %p70
    $region39: #{tpu_custom_call.1} parent=1 // pred_check_branch
      %295 = sbr.rel (%p293) target = $region41
    $region40: #{tpu_custom_call.1} parent=1 // pred_region
      %v296 = vld [vmem:[#allocation4] sm:$0x1]
      %vm297 = vcmask 1040384
      %v298 = vsel %vm297, %v296, 0.0
      %299 = vadd.xlane.f32.xlu0 %v298
      %v300 = vpop.xlane.xlu0 %299
      %v301 = vrot.slane %v300, 4
      %v302 = vadd.f32 %v300, %v301
      %v303 = vrot.slane %v302, 2
      %v304 = vadd.f32 %v302, %v303
      %v305 = vrot.slane %v304, 1
      %v306 = vadd.f32 %v304, %v305
      %s307 = vtos %v306
      %v308 = vstv %s307
      %v309 = vld [vmem:[#allocation3] sm:$0x1]
      %v310 = vsel %vm297, %v309, 0.0
      %311 = vadd.xlane.f32.xlu0 %v310
      %v312 = vpop.xlane.xlu0 %311
      %v313 = vrot.slane %v312, 4
      %v314 = vadd.f32 %v312, %v313
      %v315 = vrot.slane %v314, 2
      %v316 = vadd.f32 %v314, %v315
      %v317 = vrot.slane %v316, 1
      %v318 = vadd.f32 %v316, %v317
      %s319 = vtos %v318
      %v320 = vstv %s319
      %vm321 = vcmp.eq.f32.partialorder %v308, 0.0
      %v322 = vrcp.pop %v308
      %v323 = vmul.f32 %v320, %v322
      %v324 = vsub.f32 0.0, %v323
      %v325 = vsel %vm321, 0.0, %v324
      %vm326 = vcmask 0
      %327 = vst.msk [vmem:[#allocation13] sm:$0x1] %vm326, %v325
      %328 = vst.msk [vmem:[#allocation14] sm:$0x1] %vm326, %v308
    $region41: #{tpu_custom_call.1} parent=1 // pred_fallthru
      _
    // Predicated region
    $region42: #{tpu_custom_call.1} parent=1 // pred_check
      _
    $region43: #{tpu_custom_call.1} parent=1 // pred_check_branch
      %330 = sbr.rel (0) target = $region45
    $region44: #{tpu_custom_call.1} parent=1 // pred_region
      %s332 = ssub.s32 16, 16
      %333 = vsyncadd [#allocation7], %s332
      %s335 = sshll.u32 [#allocation13], 4
      %s336 = int_to_ptr.vmem [resolvable:$true] %s335
      %338 = dma.vmem_to_hbm [thread:$0]  %s336, 16, %s4, [#allocation7]
    $region45: #{tpu_custom_call.1} parent=1 // pred_fallthru
      _
    // Predicated region
    $region46: #{tpu_custom_call.1} parent=1 // pred_check
      _
    $region47: #{tpu_custom_call.1} parent=1 // pred_check_branch
      %340 = sbr.rel (0) target = $region49
    $region48: #{tpu_custom_call.1} parent=1 // pred_region
      %s342 = ssub.s32 16, 16
      %343 = vsyncadd [#allocation15], %s342
      %s345 = sshll.u32 [#allocation14], 4
      %s346 = int_to_ptr.vmem [resolvable:$true] %s345
      %348 = dma.vmem_to_hbm [thread:$0]  %s346, 16, %s5, [#allocation15]
    $region49: #{tpu_custom_call.1} parent=1 // pred_fallthru
      _
    // Predicated region
    $region50: #{tpu_custom_call.1} parent=1 // pred_check
      _
    $region51: #{tpu_custom_call.1} parent=1 // pred_check_branch
      %350 = sbr.rel (0) target = $region53
    $region52: #{tpu_custom_call.1} parent=1 // pred_region
      %351 = dma.done [#allocation7], 16
    $region53: #{tpu_custom_call.1} parent=1 // pred_fallthru
      _
    // Predicated region
    $region54: #{tpu_custom_call.1} parent=1 // pred_check
      _
    $region55: #{tpu_custom_call.1} parent=1 // pred_check_branch
      %353 = sbr.rel (0) target = $region57
    $region56: #{tpu_custom_call.1} parent=1 // pred_region
      %354 = dma.done [#allocation15], 16
    $region57: #{tpu_custom_call.1} parent=1 // pred_fallthru
      _
    %355 = vsyncpa [#allocation6], 1
    %356 = vsyncpa [#allocation9], 1
    %357 = vsyncpa [#allocation12], 1
    %358 = vsyncpa [#allocation7], 1
    %359 = vsyncpa [#allocation15], 1

</llo_original>
